<compile_context>
chip_gen: v7x
topology: tpu7x:2x2x1
jax: 0.10.0
libtpu: 0.0.40
codegen_flags: <defaults>
</compile_context>

<pallas_src>
import jax
import jax.numpy as jnp
from jax.experimental import pallas as pl
from jax.experimental.pallas import tpu as pltpu


def _round_up(x: int, m: int) -> int:
    return ((x + m - 1) // m) * m


def _make_kernel(matmul_dtype):
    def kernel(x_ref, w_ref, b_ref, opt_ref, out_ref):
        x = x_ref[...]          # [tile_b, F]
        w = w_ref[...]          # [F, H]  (MXU-native [K, N] orientation)
        opt = opt_ref[...]      # [H, M]
        if matmul_dtype is not None:
            x = x.astype(matmul_dtype)
            w = w.astype(matmul_dtype)      # no-op if already cast in wrapper
            opt = opt.astype(matmul_dtype)
        # hidden = context @ W^T + b  -- f32 accumulate, f32 bias add (v5e-safe)
        hidden = jnp.dot(x, w, preferred_element_type=jnp.float32) + b_ref[...]
        if matmul_dtype is not None:
            hidden = hidden.astype(matmul_dtype)
        # logit = hidden @ option  -- f32 accumulate, cast only at the store
        out_ref[...] = jnp.dot(
            hidden, opt, preferred_element_type=jnp.float32
        ).astype(out_ref.dtype)

    return kernel


def _pick_batch_tile(B: int, cap: int = 512) -> int:
    """Fixed, aligned batch tile; grid = cdiv(B, tile) with a ragged last block.

    * B > cap      -> fixed `cap` tile (multiple of 128; large tiles reach
                      85%+ of the HBM roofline in measured tiled-kernel data).
    * 256<=B<=cap  -> split into two 8-aligned tiles so the "parallel" batch
                      axis spans both TensorCores on v7x.
    * B < 256      -> one full-batch block (tiny; full-extent is always legal).
    """
    if B > cap:
        return cap
    if B >= 256:
        return _round_up((B + 1) // 2, 8)
    return B


def metrixnet_forward(context, weight, bias, option, *,
                      matmul_dtype=None, tile_b_cap=512):
    """MetrixNet forward pass.

    context: [B, F]   weight: [H, F] (native nn.Linear layout)
    bias:    [H]      option: [H, M]        returns logit: [B, M]
    """
    B, F = context.shape
    H, F_w = weight.shape
    assert F_w == F
    H_o, M = option.shape
    assert H_o == H

    # One-time layout fix: contract on the MXU-native [K, N] orientation so
    # Mosaic never re-transposes the VMEM-resident weight block per grid step.
    w_fh = weight.T                                   # [F, H]
    bias2d = jnp.reshape(bias, (1, H)).astype(jnp.float32)

    if matmul_dtype is not None:
        # Cast the reused operands once in the wrapper (halves their HBM
        # traffic and resident VMEM); context is cast inside the kernel.
        w_fh = w_fh.astype(matmul_dtype)
        option = option.astype(matmul_dtype)

    tile_b = _pick_batch_tile(B, tile_b_cap)
    grid = (pl.cdiv(B, tile_b),)

    # Explicit VMEM budget: double-buffered streamed tiles + resident
    # weight/option/bias + implicit f32 hidden temp + bf16 cast temps.
    in_item = jnp.dtype(context.dtype).itemsize
    wopt_item = jnp.dtype(w_fh.dtype).itemsize
    need = (
        2 * tile_b * F * in_item            # context tiles (double-buffered)
        + 2 * tile_b * M * in_item          # output tiles (double-buffered)
        + 2 * (F * H + H * M) * wopt_item   # resident weight / option
        + 2 * H * 4                         # resident bias
        + tile_b * H * 4                    # f32 hidden temp
        + tile_b * (F + H + M) * 2          # bf16 cast temps (worst case)
    )
    vmem_limit = int(min(max(2 * need, 8 << 20), 48 << 20))

    cost = pl.CostEstimate(
        flops=2 * B * F * H + 2 * B * H * M,
        transcendentals=0,
        bytes_accessed=(B * F + B * M) * in_item
        + (F * H + H * M) * wopt_item + H * 4,
    )

    return pl.pallas_call(
        _make_kernel(matmul_dtype),
        out_shape=jax.ShapeDtypeStruct((B, M), context.dtype),
        grid=grid,
        in_specs=[
            # context: streamed, tiled along B.
            pl.BlockSpec((tile_b, F), lambda i: (i, 0)),
            # weight / bias / option: same block every step -> VMEM-resident.
            pl.BlockSpec((F, H), lambda i: (0, 0)),
            pl.BlockSpec((1, H), lambda i: (0, 0)),
            pl.BlockSpec((H, M), lambda i: (0, 0)),
        ],
        out_specs=pl.BlockSpec((tile_b, M), lambda i: (i, 0)),
        compiler_params=pltpu.CompilerParams(
            dimension_semantics=("parallel",),   # batch tiles shard across TCs
            vmem_limit_bytes=vmem_limit,
        ),
        cost_estimate=cost,
    )(context, w_fh, bias2d, option)


def reference_forward(context, weight, bias, option):
    hidden = context @ weight.T + jnp.reshape(bias, (1, -1))
    return hidden @ option


if __name__ == "__main__":
    key = jax.random.PRNGKey(0)
    k_w, k_b, k_x1, k_o, k_x2 = jax.random.split(key, 5)

    # Module defaults: n_feature=256, n_hidden=256.
    F, H, M = 256, 256, 128
    bound = 1.0 / jnp.sqrt(jnp.float32(F))
    weight = jax.random.uniform(k_w, (H, F), jnp.float32, -bound, bound)
    bias = jax.random.uniform(k_b, (H,), jnp.float32, -bound, bound)
    option = jax.random.normal(k_o, (H, M), jnp.float32)

    # Case 1: small batch, pure-f32 path (tight tolerance).
    B1 = 8
    ctx1 = jax.random.normal(k_x1, (B1, F), jnp.float32)
    out1 = jax.block_until_ready(metrixnet_forward(ctx1, weight, bias, option))
    exp1 = reference_forward(ctx1, weight, bias, option)
    assert out1.shape == (B1, M)
    assert jnp.allclose(out1, exp1, atol=1e-3, rtol=1e-3)

    # Case 2: stacked batch -> 2 grid steps with a ragged last tile, bf16
    # MXU operands with f32 accumulation (looser tolerance).
    B2 = 300
    ctx2 = jax.random.normal(k_x2, (B2, F), jnp.float32)
    out2 = jax.block_until_ready(
        metrixnet_forward(ctx2, weight, bias, option, matmul_dtype=jnp.bfloat16))
    exp2 = reference_forward(ctx2, weight, bias, option)
    assert out2.shape == (B2, M)
    assert jnp.allclose(out2, exp2, atol=0.5, rtol=5e-2)

    print("KERNEL_OK")
</pallas_src>

<mosaic_0001>
module attributes {stable_mosaic.version = 11 : i64} {
  func.func @kernel(%arg0: i32, %arg1: memref<8x256xf32, #tpu.memory_space<vmem>>, %arg2: memref<256x256xf32, #tpu.memory_space<vmem>>, %arg3: memref<1x256xf32, #tpu.memory_space<vmem>>, %arg4: memref<256x128xf32, #tpu.memory_space<vmem>>, %arg5: memref<8x128xf32, #tpu.memory_space<vmem>>) attributes {dimension_semantics = [#tpu.dimension_semantics<parallel>], iteration_bounds = array<i64: 1>, scalar_prefetch = 0 : i64, scratch_operands = 0 : i64, tpu.core_type = #tpu.core_type<tc>, window_params = [{transform_indices = @transform_0, window_bounds = array<i64: 8, 256>}, {pipeline_mode = #tpu.pipeline_mode<synchronous>, transform_indices = @transform_1, window_bounds = array<i64: 256, 256>}, {pipeline_mode = #tpu.pipeline_mode<synchronous>, transform_indices = @transform_2, window_bounds = array<i64: 1, 256>}, {pipeline_mode = #tpu.pipeline_mode<synchronous>, transform_indices = @transform_3, window_bounds = array<i64: 256, 128>}, {transform_indices = @transform_4, window_bounds = array<i64: 8, 128>}]} {
    %c0 = arith.constant 0 : index
    %c0_0 = arith.constant 0 : index
    %0 = vector.load %arg1[%c0, %c0_0] : memref<8x256xf32, #tpu.memory_space<vmem>>, vector<8x256xf32>
    %c0_1 = arith.constant 0 : index
    %c0_2 = arith.constant 0 : index
    %1 = vector.load %arg2[%c0_1, %c0_2] : memref<256x256xf32, #tpu.memory_space<vmem>>, vector<256x256xf32>
    %c0_3 = arith.constant 0 : index
    %c0_4 = arith.constant 0 : index
    %2 = vector.load %arg4[%c0_3, %c0_4] : memref<256x128xf32, #tpu.memory_space<vmem>>, vector<256x128xf32>
    %cst = arith.constant dense<0.000000e+00> : vector<8x256xf32>
    %3 = tpu.matmul %0, %1, %cst {dimension_numbers = #tpu.dot_dimension_numbers<[1], [0], [0], [1], [0, 0, 1, 1], [], []>} : vector<8x256xf32>, vector<256x256xf32>, vector<8x256xf32> -> vector<8x256xf32>
    %c0_5 = arith.constant 0 : index
    %c0_6 = arith.constant 0 : index
    %4 = vector.load %arg3[%c0_5, %c0_6] : memref<1x256xf32, #tpu.memory_space<vmem>>, vector<1x256xf32>
    %5 = vector.broadcast %4 : vector<1x256xf32> to vector<8x256xf32>
    %6 = arith.addf %3, %5 : vector<8x256xf32>
    %cst_7 = arith.constant dense<0.000000e+00> : vector<8x128xf32>
    %7 = tpu.matmul %6, %2, %cst_7 {dimension_numbers = #tpu.dot_dimension_numbers<[1], [0], [0], [1], [0, 0, 1, 1], [], []>} : vector<8x256xf32>, vector<256x128xf32>, vector<8x128xf32> -> vector<8x128xf32>
    %c0_8 = arith.constant 0 : index
    %c0_9 = arith.constant 0 : index
    %8 = vector.load %arg5[%c0_8, %c0_9] : memref<8x128xf32, #tpu.memory_space<vmem>>, vector<8x128xf32>
    tpu.vector_store %arg5[%c0_8, %c0_9], %7 {strides = array<i32>} : memref<8x128xf32, #tpu.memory_space<vmem>>, vector<8x128xf32>,
    return
  }
  func.func @transform_0(%arg0: i32) -> (i32, i32) {
    %c0_i32 = arith.constant 0 : i32
    %c0_i32_0 = arith.constant 0 : i32
    return %arg0, %c0_i32 : i32, i32
  }
  func.func @transform_1(%arg0: i32) -> (i32, i32) {
    %c0_i32 = arith.constant 0 : i32
    %c0_i32_0 = arith.constant 0 : i32
    %c0_i32_1 = arith.constant 0 : i32
    return %c0_i32, %c0_i32_0 : i32, i32
  }
  func.func @transform_2(%arg0: i32) -> (i32, i32) {
    %c0_i32 = arith.constant 0 : i32
    %c0_i32_0 = arith.constant 0 : i32
    %c0_i32_1 = arith.constant 0 : i32
    return %c0_i32, %c0_i32_0 : i32, i32
  }
  func.func @transform_3(%arg0: i32) -> (i32, i32) {
    %c0_i32 = arith.constant 0 : i32
    %c0_i32_0 = arith.constant 0 : i32
    %c0_i32_1 = arith.constant 0 : i32
    return %c0_i32, %c0_i32_0 : i32, i32
  }
  func.func @transform_4(%arg0: i32) -> (i32, i32) {
    %c0_i32 = arith.constant 0 : i32
    %c0_i32_0 = arith.constant 0 : i32
    return %arg0, %c0_i32 : i32, i32
  }
}

</mosaic_0001>

<llo_original>
// kernel: tpu_custom_call.1
$region0: #{tpu_custom_call.1}
  #allocation0 [shape = 'u32[]', space=smem, size = 0x4, offset = 0x4, fixed_abs, tag = 'smem constant byte address 0x4 - core index']
  #allocation1 [shape = 'u32[144,128]{1,0:T(1,128)}', space=vmem, size = 0x12000, scoped, tag = 'internal scratch']
  %s0 = inlined_call_operand.hbm [shape: f32[8,256], index: 0, kind: input, shape index: {}]
  %s1 = inlined_call_operand.hbm [shape: f32[256,256], index: 1, kind: input, shape index: {}]
  %s2 = inlined_call_operand.vmem [shape: f32[1,256], index: 2, kind: input, shape index: {}]
  %s3 = inlined_call_operand.hbm [shape: f32[256,128], index: 3, kind: input, shape index: {}]
  %s4 = inlined_call_operand.hbm [shape: f32[8,128], index: 4, kind: output, shape index: {}]
  %s5 = sld [smem:[#allocation0]]
  $region38: #{tpu_custom_call.1} parent=0
    _
  %s7 = ssub.s32 1, %s5
  %s8 = scalar_select 0, %s7, %s5
  $region1: #{tpu_custom_call.1} parent=0
    #allocation2 [shape = 'u8[8192]{0}', space=vmem, size = 0x2000, scoped, tag = 'input window, operand 0, single buffered']
    #allocation3 [shape = 's32[1]{0}', space=sflag, size = 0x4, scoped, tag = 'scoped memory for tpu_custom_call.1']
    #allocation4 [shape = 's32[1]{0}', space=sflag, size = 0x4, scoped, tag = 'scoped memory for tpu_custom_call.1']
    #allocation5 [shape = 'u8[262144]{0}', space=vmem, size = 0x40000, scoped, tag = 'input window, operand 1, single buffered']
    #allocation6 [shape = 's32[1]{0}', space=sflag, size = 0x4, scoped, tag = 'scoped memory for tpu_custom_call.1']
    #allocation7 [shape = 'u8[131072]{0}', space=vmem, size = 0x20000, scoped, tag = 'input window, operand 3, single buffered']
    #allocation8 [shape = 'u8[4096]{0}', space=vmem, size = 0x1000, scoped, tag = 'output window, operand 0, single buffered']
    %9 = vsyncpa [#allocation3], 0
    %10 = vsyncpa [#allocation6], 0
    %11 = vsyncpa [#allocation4], 0
    // Predicated region
    $region2: #{tpu_custom_call.1} parent=1 // pred_check
      _
    $region3: #{tpu_custom_call.1} parent=1 // pred_check_branch
      %13 = sbr.rel (0) target = $region5
    $region4: #{tpu_custom_call.1} parent=1 // pred_region
      %s15 = ssub.s32 256, 256
      %16 = vsyncadd [#allocation3], %s15
      %s18 = sshll.u32 [#allocation2], 4
      %s19 = int_to_ptr.vmem [resolvable:$true] %s18
      %21 = dma.hbm_to_vmem [thread:$0]  %s0, 256, %s19, [#allocation3]
    $region5: #{tpu_custom_call.1} parent=1 // pred_fallthru
      _
    // Predicated region
    $region6: #{tpu_custom_call.1} parent=1 // pred_check
      _
    $region7: #{tpu_custom_call.1} parent=1 // pred_check_branch
      %23 = sbr.rel (0) target = $region9
    $region8: #{tpu_custom_call.1} parent=1 // pred_region
      %s25 = ssub.s32 8192, 8192
      %26 = vsyncadd [#allocation6], %s25
      %s27 = sshll.u32 [#allocation5], 4
      %s28 = int_to_ptr.vmem [resolvable:$true] %s27
      %33 = dma.hbm_to_vmem [thread:$0]  %s1, 8192, %s28, [#allocation6], 256, 256, 16
    $region9: #{tpu_custom_call.1} parent=1 // pred_fallthru
      _
    // Predicated region
    $region10: #{tpu_custom_call.1} parent=1 // pred_check
      _
    $region11: #{tpu_custom_call.1} parent=1 // pred_check_branch
      %35 = sbr.rel (0) target = $region13
    $region12: #{tpu_custom_call.1} parent=1 // pred_region
      _
    $region13: #{tpu_custom_call.1} parent=1 // pred_fallthru
      _
    // Predicated region
    $region14: #{tpu_custom_call.1} parent=1 // pred_check
      _
    $region15: #{tpu_custom_call.1} parent=1 // pred_check_branch
      %37 = sbr.rel (0) target = $region17
    $region16: #{tpu_custom_call.1} parent=1 // pred_region
      %s39 = ssub.s32 4096, 4096
      %40 = vsyncadd [#allocation6], %s39
      %s41 = sshll.u32 [#allocation7], 4
      %s42 = int_to_ptr.vmem [resolvable:$true] %s41
      %47 = dma.hbm_to_vmem [thread:$0]  %s3, 4096, %s42, [#allocation6], 128, 128, 8
    $region17: #{tpu_custom_call.1} parent=1 // pred_fallthru
      _
    // Predicated region
    $region18: #{tpu_custom_call.1} parent=1 // pred_check
      _
    $region19: #{tpu_custom_call.1} parent=1 // pred_check_branch
      %49 = sbr.rel (0) target = $region21
    $region20: #{tpu_custom_call.1} parent=1 // pred_region
      %50 = dma.done [#allocation3], 256
    $region21: #{tpu_custom_call.1} parent=1 // pred_fallthru
      _
    // Predicated region
    $region22: #{tpu_custom_call.1} parent=1 // pred_check
      _
    $region23: #{tpu_custom_call.1} parent=1 // pred_check_branch
      %52 = sbr.rel (0) target = $region25
    $region24: #{tpu_custom_call.1} parent=1 // pred_region
      %53 = dma.done [#allocation6], 8192
    $region25: #{tpu_custom_call.1} parent=1 // pred_fallthru
      _
    // Predicated region
    $region26: #{tpu_custom_call.1} parent=1 // pred_check
      _
    $region27: #{tpu_custom_call.1} parent=1 // pred_check_branch
      %55 = sbr.rel (0) target = $region29
    $region28: #{tpu_custom_call.1} parent=1 // pred_region
      %56 = dma.done [#allocation6], 4096
    $region29: #{tpu_custom_call.1} parent=1 // pred_fallthru
      _
    %v57 = vld [vmem:[#allocation2] sm:$0xff]
    %v58 = vld [vmem:[#allocation2 + $0x8] sm:$0xff]
    %v59 = vld [vmem:[#allocation5] sm:$0xff]
    %v60 = vld [vmem:[#allocation5 + $0x8] sm:$0xff]
    %v61 = vld [vmem:[#allocation5 + $0x10] sm:$0xff]
    %v62 = vld [vmem:[#allocation5 + $0x18] sm:$0xff]
    %v63 = vld [vmem:[#allocation5 + $0x20] sm:$0xff]
    %v64 = vld [vmem:[#allocation5 + $0x28] sm:$0xff]
    %v65 = vld [vmem:[#allocation5 + $0x30] sm:$0xff]
    %v66 = vld [vmem:[#allocation5 + $0x38] sm:$0xff]
    %v67 = vld [vmem:[#allocation5 + $0x40] sm:$0xff]
    %v68 = vld [vmem:[#allocation5 + $0x48] sm:$0xff]
    %v69 = vld [vmem:[#allocation5 + $0x50] sm:$0xff]
    %v70 = vld [vmem:[#allocation5 + $0x58] sm:$0xff]
    %v71 = vld [vmem:[#allocation5 + $0x60] sm:$0xff]
    %v72 = vld [vmem:[#allocation5 + $0x68] sm:$0xff]
    %v73 = vld [vmem:[#allocation5 + $0x70] sm:$0xff]
    %v74 = vld [vmem:[#allocation5 + $0x78] sm:$0xff]
    %v75 = vld [vmem:[#allocation5 + $0x80] sm:$0xff]
    %v76 = vld [vmem:[#allocation5 + $0x88] sm:$0xff]
    %v77 = vld [vmem:[#allocation5 + $0x90] sm:$0xff]
    %v78 = vld [vmem:[#allocation5 + $0x98] sm:$0xff]
    %v79 = vld [vmem:[#allocation5 + $0xa0] sm:$0xff]
    %v80 = vld [vmem:[#allocation5 + $0xa8] sm:$0xff]
    %v81 = vld [vmem:[#allocation5 + $0xb0] sm:$0xff]
    %v82 = vld [vmem:[#allocation5 + $0xb8] sm:$0xff]
    %v83 = vld [vmem:[#allocation5 + $0xc0] sm:$0xff]
    %v84 = vld [vmem:[#allocation5 + $0xc8] sm:$0xff]
    %v85 = vld [vmem:[#allocation5 + $0xd0] sm:$0xff]
    %v86 = vld [vmem:[#allocation5 + $0xd8] sm:$0xff]
    %v87 = vld [vmem:[#allocation5 + $0xe0] sm:$0xff]
    %v88 = vld [vmem:[#allocation5 + $0xe8] sm:$0xff]
    %v89 = vld [vmem:[#allocation5 + $0xf0] sm:$0xff]
    %v90 = vld [vmem:[#allocation5 + $0xf8] sm:$0xff]
    %v91 = vld [vmem:[#allocation5 + $0x100] sm:$0xff]
    %v92 = vld [vmem:[#allocation5 + $0x108] sm:$0xff]
    %v93 = vld [vmem:[#allocation5 + $0x110] sm:$0xff]
    %v94 = vld [vmem:[#allocation5 + $0x118] sm:$0xff]
    %v95 = vld [vmem:[#allocation5 + $0x120] sm:$0xff]
    %v96 = vld [vmem:[#allocation5 + $0x128] sm:$0xff]
    %v97 = vld [vmem:[#allocation5 + $0x130] sm:$0xff]
    %v98 = vld [vmem:[#allocation5 + $0x138] sm:$0xff]
    %v99 = vld [vmem:[#allocation5 + $0x140] sm:$0xff]
    %v100 = vld [vmem:[#allocation5 + $0x148] sm:$0xff]
    %v101 = vld [vmem:[#allocation5 + $0x150] sm:$0xff]
    %v102 = vld [vmem:[#allocation5 + $0x158] sm:$0xff]
    %v103 = vld [vmem:[#allocation5 + $0x160] sm:$0xff]
    %v104 = vld [vmem:[#allocation5 + $0x168] sm:$0xff]
    %v105 = vld [vmem:[#allocation5 + $0x170] sm:$0xff]
    %v106 = vld [vmem:[#allocation5 + $0x178] sm:$0xff]
    %v107 = vld [vmem:[#allocation5 + $0x180] sm:$0xff]
    %v108 = vld [vmem:[#allocation5 + $0x188] sm:$0xff]
    %v109 = vld [vmem:[#allocation5 + $0x190] sm:$0xff]
    %v110 = vld [vmem:[#allocation5 + $0x198] sm:$0xff]
    %v111 = vld [vmem:[#allocation5 + $0x1a0] sm:$0xff]
    %v112 = vld [vmem:[#allocation5 + $0x1a8] sm:$0xff]
    %v113 = vld [vmem:[#allocation5 + $0x1b0] sm:$0xff]
    %v114 = vld [vmem:[#allocation5 + $0x1b8] sm:$0xff]
    %v115 = vld [vmem:[#allocation5 + $0x1c0] sm:$0xff]
    %v116 = vld [vmem:[#allocation5 + $0x1c8] sm:$0xff]
    %v117 = vld [vmem:[#allocation5 + $0x1d0] sm:$0xff]
    %v118 = vld [vmem:[#allocation5 + $0x1d8] sm:$0xff]
    %v119 = vld [vmem:[#allocation5 + $0x1e0] sm:$0xff]
    %v120 = vld [vmem:[#allocation5 + $0x1e8] sm:$0xff]
    %v121 = vld [vmem:[#allocation5 + $0x1f0] sm:$0xff]
    %v122 = vld [vmem:[#allocation5 + $0x1f8] sm:$0xff]
    %v123 = vld [vmem:[#allocation7] sm:$0xff]
    %v124 = vld [vmem:[#allocation7 + $0x8] sm:$0xff]
    %v125 = vld [vmem:[#allocation7 + $0x10] sm:$0xff]
    %v126 = vld [vmem:[#allocation7 + $0x18] sm:$0xff]
    %v127 = vld [vmem:[#allocation7 + $0x20] sm:$0xff]
    %v128 = vld [vmem:[#allocation7 + $0x28] sm:$0xff]
    %v129 = vld [vmem:[#allocation7 + $0x30] sm:$0xff]
    %v130 = vld [vmem:[#allocation7 + $0x38] sm:$0xff]
    %v131 = vld [vmem:[#allocation7 + $0x40] sm:$0xff]
    %v132 = vld [vmem:[#allocation7 + $0x48] sm:$0xff]
    %v133 = vld [vmem:[#allocation7 + $0x50] sm:$0xff]
    %v134 = vld [vmem:[#allocation7 + $0x58] sm:$0xff]
    %v135 = vld [vmem:[#allocation7 + $0x60] sm:$0xff]
    %v136 = vld [vmem:[#allocation7 + $0x68] sm:$0xff]
    %v137 = vld [vmem:[#allocation7 + $0x70] sm:$0xff]
    %v138 = vld [vmem:[#allocation7 + $0x78] sm:$0xff]
    %v139 = vld [vmem:[#allocation7 + $0x80] sm:$0xff]
    %v140 = vld [vmem:[#allocation7 + $0x88] sm:$0xff]
    %v141 = vld [vmem:[#allocation7 + $0x90] sm:$0xff]
    %v142 = vld [vmem:[#allocation7 + $0x98] sm:$0xff]
    %v143 = vld [vmem:[#allocation7 + $0xa0] sm:$0xff]
    %v144 = vld [vmem:[#allocation7 + $0xa8] sm:$0xff]
    %v145 = vld [vmem:[#allocation7 + $0xb0] sm:$0xff]
    %v146 = vld [vmem:[#allocation7 + $0xb8] sm:$0xff]
    %v147 = vld [vmem:[#allocation7 + $0xc0] sm:$0xff]
    %v148 = vld [vmem:[#allocation7 + $0xc8] sm:$0xff]
    %v149 = vld [vmem:[#allocation7 + $0xd0] sm:$0xff]
    %v150 = vld [vmem:[#allocation7 + $0xd8] sm:$0xff]
    %v151 = vld [vmem:[#allocation7 + $0xe0] sm:$0xff]
    %v152 = vld [vmem:[#allocation7 + $0xe8] sm:$0xff]
    %v153 = vld [vmem:[#allocation7 + $0xf0] sm:$0xff]
    %v154 = vld [vmem:[#allocation7 + $0xf8] sm:$0xff]
    %v155 = vld [vmem:[%s2] sm:$0x3]
    %v157 = vlaneseq
    %v158 = vshrl.u32 %v157, 7
    %v159 = vsub.s32 0, %v158
    %v160 = vrot.slane %v155, %v159
    %v161 = vlaneseq
    %v162 = vshrl.u32 %v161, 7
    %v163 = vsub.s32 1, %v162
    %v164 = vrot.slane %v155, %v163
    %167 = vmatprep.subr.mxu0 %v60
    %168 = vmatpush1.msra.mxu0 %v59
    %169 = vmatprep.subr.mxu0 %v62
    %170 = vmatpush1.msra.mxu0 %v61
    %171 = vmatprep.subr.mxu0 %v64
    %172 = vmatpush1.msra.mxu0 %v63
    %173 = vmatprep.subr.mxu0 %v66
    %174 = vmatpush1.msra.mxu0 %v65
    %175 = vmatprep.subr.mxu0 %v68
    %176 = vmatpush1.msra.mxu0 %v67
    %177 = vmatprep.subr.mxu0 %v70
    %178 = vmatpush1.msra.mxu0 %v69
    %179 = vmatprep.subr.mxu0 %v72
    %180 = vmatpush1.msra.mxu0 %v71
    %181 = vmatprep.subr.mxu0 %v74
    %182 = vmatpush1.msra.mxu0 %v73
    %183 = vmatprep.subr.mxu0 %v76
    %184 = vmatpush1.msra.mxu0 %v75
    %185 = vmatprep.subr.mxu0 %v78
    %186 = vmatpush1.msra.mxu0 %v77
    %187 = vmatprep.subr.mxu0 %v80
    %188 = vmatpush1.msra.mxu0 %v79
    %189 = vmatprep.subr.mxu0 %v82
    %190 = vmatpush1.msra.mxu0 %v81
    %191 = vmatprep.subr.mxu0 %v84
    %192 = vmatpush1.msra.mxu0 %v83
    %193 = vmatprep.subr.mxu0 %v86
    %194 = vmatpush1.msra.mxu0 %v85
    %195 = vmatprep.subr.mxu0 %v88
    %196 = vmatpush1.msra.mxu0 %v87
    %197 = vmatprep.subr.mxu0 %v90
    %198 = vmatpush1.msra.mxu0 %v89
    %199 = vmatprep.subr.mxu0 %v92
    %200 = vmatpush1.msra.mxu0 %v91
    %201 = vmatprep.subr.mxu0 %v94
    %202 = vmatpush1.msra.mxu0 %v93
    %203 = vmatprep.subr.mxu0 %v96
    %204 = vmatpush1.msra.mxu0 %v95
    %205 = vmatprep.subr.mxu0 %v98
    %206 = vmatpush1.msra.mxu0 %v97
    %207 = vmatprep.subr.mxu0 %v100
    %208 = vmatpush1.msra.mxu0 %v99
    %209 = vmatprep.subr.mxu0 %v102
    %210 = vmatpush1.msra.mxu0 %v101
    %211 = vmatprep.subr.mxu0 %v104
    %212 = vmatpush1.msra.mxu0 %v103
    %213 = vmatprep.subr.mxu0 %v106
    %214 = vmatpush1.msra.mxu0 %v105
    %215 = vmatprep.subr.mxu0 %v108
    %216 = vmatpush1.msra.mxu0 %v107
    %217 = vmatprep.subr.mxu0 %v110
    %218 = vmatpush1.msra.mxu0 %v109
    %219 = vmatprep.subr.mxu0 %v112
    %220 = vmatpush1.msra.mxu0 %v111
    %221 = vmatprep.subr.mxu0 %v114
    %222 = vmatpush1.msra.mxu0 %v113
    %223 = vmatprep.subr.mxu0 %v116
    %224 = vmatpush1.msra.mxu0 %v115
    %225 = vmatprep.subr.mxu0 %v118
    %226 = vmatpush1.msra.mxu0 %v117
    %227 = vmatprep.subr.mxu0 %v120
    %228 = vmatpush1.msra.mxu0 %v119
    %229 = vmatprep.subr.mxu0 %v122
    %230 = vmatpush1.msra.mxu0 %v121
    %231 = vmatprep.mubr.f32.mxu0 %v58
    %232 = vmatmul.mubr.f32.gmra.mrb[0].mxu0 %v57
    %v233 = vpop.f32.mrb[0].mxu0
    %v234 = vadd.f32 %v160, %v233
    %v235 = vpop.f32.mrb[0].mxu0
    %v236 = vadd.f32 %v164, %v235
    %237 = vdwg.mxu0
    %238 = vmatprep.subr.mxu0 0.0
    %239 = vmatpush1.msra.mxu0 %v123
    %240 = vmatprep.subr.mxu0 0.0
    %241 = vmatpush1.msra.mxu0 %v124
    %242 = vmatprep.subr.mxu0 0.0
    %243 = vmatpush1.msra.mxu0 %v125
    %244 = vmatprep.subr.mxu0 0.0
    %245 = vmatpush1.msra.mxu0 %v126
    %246 = vmatprep.subr.mxu0 0.0
    %247 = vmatpush1.msra.mxu0 %v127
    %248 = vmatprep.subr.mxu0 0.0
    %249 = vmatpush1.msra.mxu0 %v128
    %250 = vmatprep.subr.mxu0 0.0
    %251 = vmatpush1.msra.mxu0 %v129
    %252 = vmatprep.subr.mxu0 0.0
    %253 = vmatpush1.msra.mxu0 %v130
    %254 = vmatprep.subr.mxu0 0.0
    %255 = vmatpush1.msra.mxu0 %v131
    %256 = vmatprep.subr.mxu0 0.0
    %257 = vmatpush1.msra.mxu0 %v132
    %258 = vmatprep.subr.mxu0 0.0
    %259 = vmatpush1.msra.mxu0 %v133
    %260 = vmatprep.subr.mxu0 0.0
    %261 = vmatpush1.msra.mxu0 %v134
    %262 = vmatprep.subr.mxu0 0.0
    %263 = vmatpush1.msra.mxu0 %v135
    %264 = vmatprep.subr.mxu0 0.0
    %265 = vmatpush1.msra.mxu0 %v136
    %266 = vmatprep.subr.mxu0 0.0
    %267 = vmatpush1.msra.mxu0 %v137
    %268 = vmatprep.subr.mxu0 0.0
    %269 = vmatpush1.msra.mxu0 %v138
    %270 = vmatprep.subr.mxu0 0.0
    %271 = vmatpush1.msra.mxu0 %v139
    %272 = vmatprep.subr.mxu0 0.0
    %273 = vmatpush1.msra.mxu0 %v140
    %274 = vmatprep.subr.mxu0 0.0
    %275 = vmatpush1.msra.mxu0 %v141
    %276 = vmatprep.subr.mxu0 0.0
    %277 = vmatpush1.msra.mxu0 %v142
    %278 = vmatprep.subr.mxu0 0.0
    %279 = vmatpush1.msra.mxu0 %v143
    %280 = vmatprep.subr.mxu0 0.0
    %281 = vmatpush1.msra.mxu0 %v144
    %282 = vmatprep.subr.mxu0 0.0
    %283 = vmatpush1.msra.mxu0 %v145
    %284 = vmatprep.subr.mxu0 0.0
    %285 = vmatpush1.msra.mxu0 %v146
    %286 = vmatprep.subr.mxu0 0.0
    %287 = vmatpush1.msra.mxu0 %v147
    %288 = vmatprep.subr.mxu0 0.0
    %289 = vmatpush1.msra.mxu0 %v148
    %290 = vmatprep.subr.mxu0 0.0
    %291 = vmatpush1.msra.mxu0 %v149
    %292 = vmatprep.subr.mxu0 0.0
    %293 = vmatpush1.msra.mxu0 %v150
    %294 = vmatprep.subr.mxu0 0.0
    %295 = vmatpush1.msra.mxu0 %v151
    %296 = vmatprep.subr.mxu0 0.0
    %297 = vmatpush1.msra.mxu0 %v152
    %298 = vmatprep.subr.mxu0 0.0
    %299 = vmatpush1.msra.mxu0 %v153
    %300 = vmatprep.subr.mxu0 0.0
    %301 = vmatpush1.msra.mxu0 %v154
    %302 = vmatprep.mubr.f32.mxu0 %v236
    %303 = vmatmul.mubr.f32.gmra.mrb[0].mxu0 %v234
    %v304 = vpop.f32.mrb[0].mxu0
    %v305 = vadd.f32 0.0, %v304
    %v306 = vpop.f32.mrb[0].mxu0
    %307 = vdwg.mxu0
    %308 = vst [vmem:[#allocation8] sm:$0xff] %v305
    // Predicated region
    $region30: #{tpu_custom_call.1} parent=1 // pred_check
      _
    $region31: #{tpu_custom_call.1} parent=1 // pred_check_branch
      %310 = sbr.rel (0) target = $region33
    $region32: #{tpu_custom_call.1} parent=1 // pred_region
      %s312 = ssub.s32 128, 128
      %313 = vsyncadd [#allocation4], %s312
      %s315 = sshll.u32 [#allocation8], 4
      %s316 = int_to_ptr.vmem [resolvable:$true] %s315
      %318 = dma.vmem_to_hbm [thread:$0]  %s316, 128, %s4, [#allocation4]
    $region33: #{tpu_custom_call.1} parent=1 // pred_fallthru
      _
    // Predicated region
    $region34: #{tpu_custom_call.1} parent=1 // pred_check
      _
    $region35: #{tpu_custom_call.1} parent=1 // pred_check_branch
      %320 = sbr.rel (0) target = $region37
    $region36: #{tpu_custom_call.1} parent=1 // pred_region
      %321 = dma.done [#allocation4], 128
    $region37: #{tpu_custom_call.1} parent=1 // pred_fallthru
      _
    %322 = vsyncpa [#allocation3], 1
    %323 = vsyncpa [#allocation6], 1
    %324 = vsyncpa [#allocation4], 1

</llo_original>
